<compile_context>
chip_gen: v7x
topology: tpu7x:2x2x1
jax: 0.10.0
libtpu: 0.0.40
codegen_flags: <defaults>
</compile_context>

<pallas_src>
import math

import jax
import jax.numpy as jnp
from jax.experimental import pallas as pl
from jax.experimental.pallas import tpu as pltpu


def _pe2d_kernel(coef_ref, out_ref):
    """One (tile_rows, w/gp, PW) block of the packed PE table.

    coef_ref : (4, PW) f32 per-lane constants (col = lane % D, b = lane // D):
        row 0: 1/div_term[col//2]        on first-half cols, 0 elsewhere
        row 1: pi/2 on first-half cos cols,                  0 elsewhere
        row 2: gp/div_term[(col-half)//2] on second-half cols, 0 elsewhere
        row 3: b/div_term + cos-phase     on second-half cols, 0 elsewhere
    out_ref  : (tile_rows, w/gp, PW) f32 with
        out[t, m, b*D + col] == PE[(i0 + t)*w + m*gp + b, col]
    """
    rt, wg, pw = out_ref.shape
    inv_w = coef_ref[0:1, :]
    ph_w = coef_ref[1:2, :]
    ginv_h = coef_ref[2:3, :]
    off_h = coef_ref[3:4, :]

    # Rank-1 factors: transcendentals only on the small (rt|wg, PW) tables.
    # (iota in int32 + cast is on the tiny factors only, negligible cost.)
    row0 = (pl.program_id(0) * rt).astype(jnp.float32)
    rowf = jax.lax.broadcasted_iota(jnp.int32, (rt, pw), 0).astype(jnp.float32) + row0
    th = jnp.sin(rowf * inv_w + ph_w)            # exactly 0 on second-half lanes
    mf = jax.lax.broadcasted_iota(jnp.int32, (wg, pw), 0).astype(jnp.float32)
    tw = jnp.sin(mf * ginv_h + off_h)            # exactly 0 on first-half lanes

    # Assemble the tile: one broadcast-add per output element, full-lane stores.
    out_ref[...] = th[:, None, :] + tw[None, :, :]


def _choose_row_tile(h, row_bytes, target_bytes=2 << 20):
    """Largest divisor of h whose output block stays under ~2 MiB per buffer;
    when the grid has >1 step, prefer an even step count (v7x 2-TC balance)."""
    divisors = [d for d in range(1, h + 1) if h % d == 0]
    fitting = [d for d in divisors if d * row_bytes <= target_bytes] or [1]
    rt = fitting[-1]
    if h // rt > 1 and (h // rt) % 2 == 1:
        even = [d for d in fitting if (h // d) % 2 == 0]
        if even:
            rt = even[-1]
    return rt


def positional_encoding_2d(h, w, dembed, denominator=10000.0):
    """Pallas equivalent of PositionalEncoding2d(dembed, denominator)(h, w)."""
    # --- buffer setup, identical to the torch __init__ ----------------------
    dembed1d = dembed // 2
    indexes = jnp.arange(0, dembed1d, 2, dtype=jnp.float32)
    div_term = denominator ** (indexes / dembed1d)             # (L,)
    L = int(indexes.shape[0])
    half = 2 * L                                               # one coordinate's width
    D = 4 * L                                                  # total output width

    # Per-logical-column constants (reciprocal precomputed once on host).
    inv = jnp.repeat(1.0 / div_term, 2)                        # col -> 1/div_term[col//2]
    phase = jnp.where(jnp.arange(half) % 2 == 1, jnp.pi / 2, 0.0)   # cos columns
    zeros = jnp.zeros((half,), jnp.float32)
    inv_w_col = jnp.concatenate([inv, zeros])                  # active on first half
    ph_w_col = jnp.concatenate([phase, zeros])
    inv_h_col = jnp.concatenate([zeros, inv])                  # active on second half
    ph_h_col = jnp.concatenate([zeros, phase])

    # Lane packing: gp image columns per lane row -> PW = gp*D multiple of 128
    # (unmasked full-lane stores).  Fallback gp=1 (correct, lane-masked stores)
    # when gp does not divide w.
    g = 128 // math.gcd(D, 128)
    gp = g if w % g == 0 else 1
    PW = gp * D
    wg = w // gp

    b_lane = jnp.repeat(jnp.arange(gp, dtype=jnp.float32), D)  # lane // D
    coef = jnp.stack([
        jnp.tile(inv_w_col, gp),                               # inv_w
        jnp.tile(ph_w_col, gp),                                # ph_w
        gp * jnp.tile(inv_h_col, gp),                          # ginv_h
        b_lane * jnp.tile(inv_h_col, gp) + jnp.tile(ph_h_col, gp),   # off_h
    ]).astype(jnp.float32)                                     # (4, PW)

    # --- tiling (exact grid: tile_rows divides h, no padded output rows) -----
    row_bytes = wg * PW * 4
    tile_rows = _choose_row_tile(h, row_bytes)
    num_tiles = h // tile_rows

    out3 = pl.pallas_call(
        _pe2d_kernel,
        out_shape=jax.ShapeDtypeStruct((h, wg, PW), jnp.float32),
        grid=(num_tiles,),
        in_specs=[pl.BlockSpec((4, PW), lambda i: (0, 0))],
        out_specs=pl.BlockSpec((tile_rows, wg, PW), lambda i: (i, 0, 0)),
        compiler_params=pltpu.CompilerParams(
            dimension_semantics=("parallel",)),
    )(coef)

    # Free contiguous re-view: (h, w/gp, gp*D) -> (h*w, D).  No slice, no copy.
    return out3.reshape(h * w, D)


def _reference(h, w, dembed, denominator=10000.0):
    """Pure-JAX transcription of the torch forward, for verification."""
    dembed1d = dembed // 2
    indexes = jnp.arange(0, dembed1d, 2, dtype=jnp.float32)
    div_term = denominator ** (indexes / dembed1d)

    w_indexes = jnp.repeat(jnp.arange(h, dtype=jnp.float32), w)
    h_indexes = jnp.tile(jnp.arange(w, dtype=jnp.float32), h)

    def encode(x):
        s = jnp.sin(x[:, None] / div_term)
        c = jnp.cos(x[:, None] / div_term)
        return jnp.stack([s, c], axis=-1).reshape(x.shape[0], -1)

    return jnp.concatenate([encode(w_indexes), encode(h_indexes)], axis=-1)


if __name__ == "__main__":
    key = jax.random.PRNGKey(0)
    # Dummy NCHW feature map, only used to derive the spatial size (h, w),
    # matching how PositionalEncoding2d is used downstream.
    x = jax.random.normal(key, (2, 4, 16, 16), dtype=jnp.float32)
    _, _, h, w = x.shape
    dembed = 32

    out = positional_encoding_2d(h, w, dembed)
    out = jax.block_until_ready(out)

    ref = _reference(h, w, dembed)
    assert out.shape == ref.shape, (out.shape, ref.shape)
    max_err = float(jnp.max(jnp.abs(out - ref)))
    assert max_err < 5e-5, max_err
    print("KERNEL_OK")
</pallas_src>

<mosaic_0001>
module attributes {stable_mosaic.version = 11 : i64} {
  func.func @_pe2d_kernel(%arg0: i32, %arg1: memref<4x128xf32, #tpu.memory_space<vmem>>, %arg2: memref<16x4x128xf32, #tpu.memory_space<vmem>>) attributes {dimension_semantics = [#tpu.dimension_semantics<parallel>], iteration_bounds = array<i64: 1>, scalar_prefetch = 0 : i64, scratch_operands = 0 : i64, tpu.core_type = #tpu.core_type<tc>, window_params = [{pipeline_mode = #tpu.pipeline_mode<synchronous>, transform_indices = @transform_0, window_bounds = array<i64: 4, 128>}, {transform_indices = @transform_1, window_bounds = array<i64: 16, 4, 128>}]} {
    %c0 = arith.constant 0 : index
    %c0_0 = arith.constant 0 : index
    %0 = vector.load %arg1[%c0, %c0_0] : memref<4x128xf32, #tpu.memory_space<vmem>>, vector<1x128xf32>
    %c1 = arith.constant 1 : index
    %c0_1 = arith.constant 0 : index
    %1 = vector.load %arg1[%c1, %c0_1] : memref<4x128xf32, #tpu.memory_space<vmem>>, vector<1x128xf32>
    %c2 = arith.constant 2 : index
    %c0_2 = arith.constant 0 : index
    %2 = vector.load %arg1[%c2, %c0_2] : memref<4x128xf32, #tpu.memory_space<vmem>>, vector<1x128xf32>
    %c3 = arith.constant 3 : index
    %c0_3 = arith.constant 0 : index
    %3 = vector.load %arg1[%c3, %c0_3] : memref<4x128xf32, #tpu.memory_space<vmem>>, vector<1x128xf32>
    %c16_i32 = arith.constant 16 : i32
    %4 = arith.muli %arg0, %c16_i32 : i32
    %5 = arith.sitofp %4 : i32 to f32
    %6 = tpu.iota {dimensions = array<i32: 0>} : vector<16x128xi32>
    %7 = arith.sitofp %6 : vector<16x128xi32> to vector<16x128xf32>
    %8 = vector.broadcast %5 : f32 to vector<16x128xf32>
    %9 = arith.addf %7, %8 : vector<16x128xf32>
    %10 = vector.broadcast %0 : vector<1x128xf32> to vector<16x128xf32>
    %11 = arith.mulf %9, %10 : vector<16x128xf32>
    %12 = vector.broadcast %1 : vector<1x128xf32> to vector<16x128xf32>
    %13 = arith.addf %11, %12 : vector<16x128xf32>
    %14 = math.sin %13 : vector<16x128xf32>
    %15 = tpu.iota {dimensions = array<i32: 0>} : vector<4x128xi32>
    %16 = arith.sitofp %15 : vector<4x128xi32> to vector<4x128xf32>
    %17 = vector.broadcast %2 : vector<1x128xf32> to vector<4x128xf32>
    %18 = arith.mulf %16, %17 : vector<4x128xf32>
    %19 = vector.broadcast %3 : vector<1x128xf32> to vector<4x128xf32>
    %20 = arith.addf %18, %19 : vector<4x128xf32>
    %21 = math.sin %20 : vector<4x128xf32>
    %22 = vector.shape_cast %14 : vector<16x128xf32> to vector<16x1x128xf32>
    %23 = vector.shape_cast %21 : vector<4x128xf32> to vector<1x4x128xf32>
    %24 = vector.broadcast %22 : vector<16x1x128xf32> to vector<16x4x128xf32>
    %25 = vector.broadcast %23 : vector<1x4x128xf32> to vector<16x4x128xf32>
    %26 = arith.addf %24, %25 : vector<16x4x128xf32>
    %c0_4 = arith.constant 0 : index
    %c0_5 = arith.constant 0 : index
    %c0_6 = arith.constant 0 : index
    %27 = vector.load %arg2[%c0_4, %c0_5, %c0_6] : memref<16x4x128xf32, #tpu.memory_space<vmem>>, vector<16x4x128xf32>
    tpu.vector_store %arg2[%c0_4, %c0_5, %c0_6], %26 {strides = array<i32>} : memref<16x4x128xf32, #tpu.memory_space<vmem>>, vector<16x4x128xf32>,
    return
  }
  func.func @transform_0(%arg0: i32) -> (i32, i32) {
    %c0_i32 = arith.constant 0 : i32
    %c0_i32_0 = arith.constant 0 : i32
    %c0_i32_1 = arith.constant 0 : i32
    return %c0_i32, %c0_i32_0 : i32, i32
  }
  func.func @transform_1(%arg0: i32) -> (i32, i32, i32) {
    %c0_i32 = arith.constant 0 : i32
    %c0_i32_0 = arith.constant 0 : i32
    %c0_i32_1 = arith.constant 0 : i32
    return %arg0, %c0_i32, %c0_i32_0 : i32, i32, i32
  }
}

</mosaic_0001>

<llo_original>
// kernel: tpu_custom_call.1
$region0: #{tpu_custom_call.1}
  #allocation0 [shape = 'u32[]', space=smem, size = 0x4, offset = 0x4, fixed_abs, tag = 'smem constant byte address 0x4 - core index']
  #allocation1 [shape = 'u32[144,128]{1,0:T(1,128)}', space=vmem, size = 0x12000, scoped, tag = 'internal scratch']
  %s0 = inlined_call_operand.hbm [shape: f32[4,128], index: 0, kind: input, shape index: {}]
  %s1 = inlined_call_operand.hbm [shape: f32[16,4,128], index: 1, kind: output, shape index: {}]
  %s2 = sld [smem:[#allocation0]]
  $region18: #{tpu_custom_call.1} parent=0
    _
  %s4 = ssub.s32 1, %s2
  %s5 = scalar_select 0, %s4, %s2
  $region1: #{tpu_custom_call.1} parent=0
    #allocation2 [shape = 'u8[2048]{0}', space=vmem, size = 0x800, scoped, tag = 'input window, operand 0, single buffered']
    #allocation3 [shape = 's32[1]{0}', space=sflag, size = 0x4, scoped, tag = 'scoped memory for tpu_custom_call.1']
    #allocation4 [shape = 's32[1]{0}', space=sflag, size = 0x4, scoped, tag = 'scoped memory for tpu_custom_call.1']
    #allocation5 [shape = 'u8[32768]{0}', space=vmem, size = 0x8000, scoped, tag = 'output window, operand 0, single buffered']
    %6 = vsyncpa [#allocation3], 0
    %7 = vsyncpa [#allocation4], 0
    // Predicated region
    $region2: #{tpu_custom_call.1} parent=1 // pred_check
      _
    $region3: #{tpu_custom_call.1} parent=1 // pred_check_branch
      %9 = sbr.rel (0) target = $region5
    $region4: #{tpu_custom_call.1} parent=1 // pred_region
      %s11 = ssub.s32 64, 64
      %12 = vsyncadd [#allocation3], %s11
      %s14 = sshll.u32 [#allocation2], 4
      %s15 = int_to_ptr.vmem [resolvable:$true] %s14
      %17 = dma.hbm_to_vmem [thread:$0]  %s0, 64, %s15, [#allocation3]
    $region5: #{tpu_custom_call.1} parent=1 // pred_fallthru
      _
    // Predicated region
    $region6: #{tpu_custom_call.1} parent=1 // pred_check
      _
    $region7: #{tpu_custom_call.1} parent=1 // pred_check_branch
      %19 = sbr.rel (0) target = $region9
    $region8: #{tpu_custom_call.1} parent=1 // pred_region
      %20 = dma.done [#allocation3], 64
    $region9: #{tpu_custom_call.1} parent=1 // pred_fallthru
      _
    %v21 = vld [vmem:[#allocation2] sm:$0x1]
    %v22 = vld [vmem:[#allocation2 + $0x1] sm:$0x1]
    %v23 = vld [vmem:[#allocation2 + $0x2] sm:$0x1]
    %v24 = vld [vmem:[#allocation2 + $0x3] sm:$0x1]
    %s25 = smul.u32 0, 16
    %s26 = scvt.s32.f32 %s25
    %v27 = vlaneseq
    %v28 = vshrl.u32 %v27, 7
    %v29 = vadd.s32 %v28, 8
    %v30 = vcvt.s32.f32 %v28
    %v31 = vcvt.s32.f32 %v29
    %v32 = vstv %s26
    %v33 = vadd.f32 %v30, %v32
    %v34 = vadd.f32 %v31, %v32
    %v35 = vlaneseq
    %v36 = vshrl.u32 %v35, 7
    %v37 = vsub.s32 0, %v36
    %v38 = vrot.slane %v21, %v37
    %v39 = vmul.f32 %v33, %v38
    %v40 = vmul.f32 %v34, %v38
    %v41 = vlaneseq
    %v42 = vshrl.u32 %v41, 7
    %v43 = vsub.s32 0, %v42
    %v44 = vrot.slane %v22, %v43
    %v45 = vadd.f32 %v39, %v44
    %v46 = vadd.f32 %v40, %v44
    %v47 = vand.u32 2147483647, %v45
    %vm48 = vcmp.le.f32.partialorder %v47, 0.7853982
    %vm49 = vcmp.lt.s32.totalorder %v45, 0
    %v50 = vand.u32 %v45, 2139095040
    %v51 = vshrl.u32 %v50, 23
    %v52 = vsub.s32 %v51, 127
    %v53 = vand.u32 2147483647, %v45
    %v54 = vand.u32 %v53, 8388607
    %v55 = vor.u32 %v54, 8388608
    %v56 = vsub.s32 0, %v55
    %v57 = vadd.s32 %v52, 1
    %vm58 = vcmp.gt.s32.totalorder %v57, 0
    %v59 = vsel %vm58, %v57, 0
    %v60 = vshrl.u32 %v59, 5
    %v61 = vand.u32 %v59, 31
    %v62 = vsub.s32 32, %v61
    %v63 = vshrl.u32 683565275, %v62
    %v64 = vshll.u32 683565275, %v61
    %v65 = vshrl.u32 2475754826, %v62
    %v66 = vor.u32 %v64, %v65
    %v67 = vshll.u32 2475754826, %v61
    %v68 = vshrl.u32 2131351028, %v62
    %v69 = vor.u32 %v67, %v68
    %v70 = vshll.u32 2131351028, %v61
    %v71 = vshrl.u32 2102212464, %v62
    %v72 = vor.u32 %v70, %v71
    %v73 = vshll.u32 2102212464, %v61
    %v74 = vshrl.u32 920167782, %v62
    %v75 = vor.u32 %v73, %v74
    %v76 = vshll.u32 920167782, %v61
    %v77 = vshrl.u32 1326507024, %v62
    %v78 = vor.u32 %v76, %v77
    %vm79 = vcmp.lt.s32.totalorder %v60, 1
    %vm80 = vcmp.lt.s32.totalorder %v60, 2
    %vm81 = vcmp.lt.s32.totalorder %v60, 3
    %vm82 = vcmp.lt.s32.totalorder %v60, 4
    %v83 = vsel %vm79, %v63, %v66
    %v84 = vsel %vm82, %v72, 2102212464
    %v85 = vsel %vm81, %v69, %v84
    %v86 = vsel %vm80, %v83, %v85
    %v87 = vsel %vm79, %v66, %v69
    %v88 = vsel %vm82, %v75, 920167782
    %v89 = vsel %vm81, %v72, %v88
    %v90 = vsel %vm80, %v87, %v89
    %v91 = vsel %vm79, %v69, %v72
    %v92 = vsel %vm82, %v78, 1326507024
    %v93 = vsel %vm81, %v75, %v92
    %v94 = vsel %vm80, %v91, %v93
    %v95 = vshll.u32 %v55, 8
    %v96 = vmul.u32.u64.compose %v95, %v94
    %v97 = vextract.low.u32 %v96
    %v98 = vextract.high.u32 %v96
    %v99 = vmul.u32.u64.compose %v95, %v90
    %v100 = vextract.low.u32 %v99
    %v101 = vextract.high.u32 %v99
    %v102 = vmul.u32 %v95, %v86
    %v103 = vadd.s32 %v98, %v100
    %vm104 = vc.u32 %v98, %v100
    %v105 = vadd.s32 %v101, 1
    %v106 = vsel %vm104, %v105, %v101
    %v107 = vadd.s32 %v102, %v106
    %v108 = vadd.s32 %v107, 536870912
    %v109 = vshrl.u32 %v108, 30
    %v110 = vshll.u32 %v109, 30
    %v111 = vsub.s32 %v107, %v110
    %vm112 = vcmp.lt.s32.totalorder %v111, 0
    %v113 = vsub.s32 0, %v111
    %v114 = vsel %vm112, %v113, %v111
    %v115 = vclz %v114
    %v116 = vsub.s32 %v115, 2
    %vm117 = vcmp.gt.s32.totalorder 0, %v116
    %v118 = vsel %vm117, 0, %v116
    %v119 = vsub.s32 32, %v118
    %v120 = vshll.u32 %v111, %v118
    %v121 = vshrl.u32 %v103, %v119
    %v122 = vor.u32 %v120, %v121
    %v123 = vsub.s32 4294967266, %v118
    %v124 = vadd.s32 %v123, 127
    %v125 = vshll.u32 %v124, 23
    %v126 = vor.u32 4788187, %v125
    %v127 = vand.u32 2147483647, %v126
    %v129 = vcvt.s32.f32 %v122
    %v130 = vmul.f32 %v129, %v127
    %v131 = vxor.u32 %v130, 2147483648
    %v132 = vsel %vm49, %v131, %v130
    %v133 = vsub.s32 4, %v109
    %v134 = vsel %vm49, %v133, %v109
    %v135 = vsel %vm48, %v45, %v132
    %v136 = vsel %vm48, 0, %v134
    %v137 = vcosq.f32.pop %v135
    %v138 = vsinq.f32.pop %v135
    %vm139 = vweird.f32 %v45
    %v140 = vadd.s32 %v136, 3
    %v141 = vand.u32 %v140, 3
    %vm142 = vcmp.lt.s32.totalorder %v141, 2
    %vm143 = vcmp.eq.s32.totalorder %v141, 0
    %v144 = vxor.u32 %v138, 2147483648
    %v145 = vsel %vm143, %v137, %v144
    %vm146 = vcmp.eq.s32.totalorder %v141, 2
    %v147 = vxor.u32 %v137, 2147483648
    %v148 = vsel %vm146, %v147, %v138
    %v149 = vsel %vm142, %v145, %v148
    %v150 = vsel %vm139, nan, %v149
    %v151 = vand.u32 2147483647, %v46
    %vm152 = vcmp.le.f32.partialorder %v151, 0.7853982
    %vm153 = vcmp.lt.s32.totalorder %v46, 0
    %v154 = vand.u32 %v46, 2139095040
    %v155 = vshrl.u32 %v154, 23
    %v156 = vsub.s32 %v155, 127
    %v157 = vand.u32 2147483647, %v46
    %v158 = vand.u32 %v157, 8388607
    %v159 = vor.u32 %v158, 8388608
    %v160 = vsub.s32 0, %v159
    %v161 = vadd.s32 %v156, 1
    %vm162 = vcmp.gt.s32.totalorder %v161, 0
    %v163 = vsel %vm162, %v161, 0
    %v164 = vshrl.u32 %v163, 5
    %v165 = vand.u32 %v163, 31
    %v166 = vsub.s32 32, %v165
    %v167 = vshrl.u32 683565275, %v166
    %v168 = vshll.u32 683565275, %v165
    %v169 = vshrl.u32 2475754826, %v166
    %v170 = vor.u32 %v168, %v169
    %v171 = vshll.u32 2475754826, %v165
    %v172 = vshrl.u32 2131351028, %v166
    %v173 = vor.u32 %v171, %v172
    %v174 = vshll.u32 2131351028, %v165
    %v175 = vshrl.u32 2102212464, %v166
    %v176 = vor.u32 %v174, %v175
    %v177 = vshll.u32 2102212464, %v165
    %v178 = vshrl.u32 920167782, %v166
    %v179 = vor.u32 %v177, %v178
    %v180 = vshll.u32 920167782, %v165
    %v181 = vshrl.u32 1326507024, %v166
    %v182 = vor.u32 %v180, %v181
    %vm183 = vcmp.lt.s32.totalorder %v164, 1
    %vm184 = vcmp.lt.s32.totalorder %v164, 2
    %vm185 = vcmp.lt.s32.totalorder %v164, 3
    %vm186 = vcmp.lt.s32.totalorder %v164, 4
    %v187 = vsel %vm183, %v167, %v170
    %v188 = vsel %vm186, %v176, 2102212464
    %v189 = vsel %vm185, %v173, %v188
    %v190 = vsel %vm184, %v187, %v189
    %v191 = vsel %vm183, %v170, %v173
    %v192 = vsel %vm186, %v179, 920167782
    %v193 = vsel %vm185, %v176, %v192
    %v194 = vsel %vm184, %v191, %v193
    %v195 = vsel %vm183, %v173, %v176
    %v196 = vsel %vm186, %v182, 1326507024
    %v197 = vsel %vm185, %v179, %v196
    %v198 = vsel %vm184, %v195, %v197
    %v199 = vshll.u32 %v159, 8
    %v200 = vmul.u32.u64.compose %v199, %v198
    %v201 = vextract.low.u32 %v200
    %v202 = vextract.high.u32 %v200
    %v203 = vmul.u32.u64.compose %v199, %v194
    %v204 = vextract.low.u32 %v203
    %v205 = vextract.high.u32 %v203
    %v206 = vmul.u32 %v199, %v190
    %v207 = vadd.s32 %v202, %v204
    %vm208 = vc.u32 %v202, %v204
    %v209 = vadd.s32 %v205, 1
    %v210 = vsel %vm208, %v209, %v205
    %v211 = vadd.s32 %v206, %v210
    %v212 = vadd.s32 %v211, 536870912
    %v213 = vshrl.u32 %v212, 30
    %v214 = vshll.u32 %v213, 30
    %v215 = vsub.s32 %v211, %v214
    %vm216 = vcmp.lt.s32.totalorder %v215, 0
    %v217 = vsub.s32 0, %v215
    %v218 = vsel %vm216, %v217, %v215
    %v219 = vclz %v218
    %v220 = vsub.s32 %v219, 2
    %vm221 = vcmp.gt.s32.totalorder 0, %v220
    %v222 = vsel %vm221, 0, %v220
    %v223 = vsub.s32 32, %v222
    %v224 = vshll.u32 %v215, %v222
    %v225 = vshrl.u32 %v207, %v223
    %v226 = vor.u32 %v224, %v225
    %v227 = vsub.s32 4294967266, %v222
    %v228 = vadd.s32 %v227, 127
    %v229 = vshll.u32 %v228, 23
    %v230 = vor.u32 4788187, %v229
    %v231 = vand.u32 2147483647, %v230
    %v233 = vcvt.s32.f32 %v226
    %v234 = vmul.f32 %v233, %v231
    %v235 = vxor.u32 %v234, 2147483648
    %v236 = vsel %vm153, %v235, %v234
    %v237 = vsub.s32 4, %v213
    %v238 = vsel %vm153, %v237, %v213
    %v239 = vsel %vm152, %v46, %v236
    %v240 = vsel %vm152, 0, %v238
    %v241 = vcosq.f32.pop %v239
    %v242 = vsinq.f32.pop %v239
    %vm243 = vweird.f32 %v46
    %v244 = vadd.s32 %v240, 3
    %v245 = vand.u32 %v244, 3
    %vm246 = vcmp.lt.s32.totalorder %v245, 2
    %vm247 = vcmp.eq.s32.totalorder %v245, 0
    %v248 = vxor.u32 %v242, 2147483648
    %v249 = vsel %vm247, %v241, %v248
    %vm250 = vcmp.eq.s32.totalorder %v245, 2
    %v251 = vxor.u32 %v241, 2147483648
    %v252 = vsel %vm250, %v251, %v242
    %v253 = vsel %vm246, %v249, %v252
    %v254 = vsel %vm243, nan, %v253
    %v255 = vlaneseq
    %v256 = vshrl.u32 %v255, 7
    %v257 = vsub.s32 0, %v256
    %v258 = vrot.slane %v23, %v257
    %v259 = vmul.f32 %v30, %v258
    %v260 = vlaneseq
    %v261 = vshrl.u32 %v260, 7
    %v262 = vsub.s32 0, %v261
    %v263 = vrot.slane %v24, %v262
    %v264 = vadd.f32 %v259, %v263
    %v265 = vand.u32 2147483647, %v264
    %vm266 = vcmp.le.f32.partialorder %v265, 0.7853982
    %vm267 = vcmp.lt.s32.totalorder %v264, 0
    %v268 = vand.u32 %v264, 2139095040
    %v269 = vshrl.u32 %v268, 23
    %v270 = vsub.s32 %v269, 127
    %v271 = vand.u32 2147483647, %v264
    %v272 = vand.u32 %v271, 8388607
    %v273 = vor.u32 %v272, 8388608
    %v274 = vsub.s32 0, %v273
    %v275 = vadd.s32 %v270, 1
    %vm276 = vcmp.gt.s32.totalorder %v275, 0
    %v277 = vsel %vm276, %v275, 0
    %v278 = vshrl.u32 %v277, 5
    %v279 = vand.u32 %v277, 31
    %v280 = vsub.s32 32, %v279
    %v281 = vshrl.u32 683565275, %v280
    %v282 = vshll.u32 683565275, %v279
    %v283 = vshrl.u32 2475754826, %v280
    %v284 = vor.u32 %v282, %v283
    %v285 = vshll.u32 2475754826, %v279
    %v286 = vshrl.u32 2131351028, %v280
    %v287 = vor.u32 %v285, %v286
    %v288 = vshll.u32 2131351028, %v279
    %v289 = vshrl.u32 2102212464, %v280
    %v290 = vor.u32 %v288, %v289
    %v291 = vshll.u32 2102212464, %v279
    %v292 = vshrl.u32 920167782, %v280
    %v293 = vor.u32 %v291, %v292
    %v294 = vshll.u32 920167782, %v279
    %v295 = vshrl.u32 1326507024, %v280
    %v296 = vor.u32 %v294, %v295
    %vm297 = vcmp.lt.s32.totalorder %v278, 1
    %vm298 = vcmp.lt.s32.totalorder %v278, 2
    %vm299 = vcmp.lt.s32.totalorder %v278, 3
    %vm300 = vcmp.lt.s32.totalorder %v278, 4
    %v301 = vsel %vm297, %v281, %v284
    %v302 = vsel %vm300, %v290, 2102212464
    %v303 = vsel %vm299, %v287, %v302
    %v304 = vsel %vm298, %v301, %v303
    %v305 = vsel %vm297, %v284, %v287
    %v306 = vsel %vm300, %v293, 920167782
    %v307 = vsel %vm299, %v290, %v306
    %v308 = vsel %vm298, %v305, %v307
    %v309 = vsel %vm297, %v287, %v290
    %v310 = vsel %vm300, %v296, 1326507024
    %v311 = vsel %vm299, %v293, %v310
    %v312 = vsel %vm298, %v309, %v311
    %v313 = vshll.u32 %v273, 8
    %v314 = vmul.u32.u64.compose %v313, %v312
    %v315 = vextract.low.u32 %v314
    %v316 = vextract.high.u32 %v314
    %v317 = vmul.u32.u64.compose %v313, %v308
    %v318 = vextract.low.u32 %v317
    %v319 = vextract.high.u32 %v317
    %v320 = vmul.u32 %v313, %v304
    %v321 = vadd.s32 %v316, %v318
    %vm322 = vc.u32 %v316, %v318
    %v323 = vadd.s32 %v319, 1
    %v324 = vsel %vm322, %v323, %v319
    %v325 = vadd.s32 %v320, %v324
    %v326 = vadd.s32 %v325, 536870912
    %v327 = vshrl.u32 %v326, 30
    %v328 = vshll.u32 %v327, 30
    %v329 = vsub.s32 %v325, %v328
    %vm330 = vcmp.lt.s32.totalorder %v329, 0
    %v331 = vsub.s32 0, %v329
    %v332 = vsel %vm330, %v331, %v329
    %v333 = vclz %v332
    %v334 = vsub.s32 %v333, 2
    %vm335 = vcmp.gt.s32.totalorder 0, %v334
    %v336 = vsel %vm335, 0, %v334
    %v337 = vsub.s32 32, %v336
    %v338 = vshll.u32 %v329, %v336
    %v339 = vshrl.u32 %v321, %v337
    %v340 = vor.u32 %v338, %v339
    %v341 = vsub.s32 4294967266, %v336
    %v342 = vadd.s32 %v341, 127
    %v343 = vshll.u32 %v342, 23
    %v344 = vor.u32 4788187, %v343
    %v345 = vand.u32 2147483647, %v344
    %v347 = vcvt.s32.f32 %v340
    %v348 = vmul.f32 %v347, %v345
    %v349 = vxor.u32 %v348, 2147483648
    %v350 = vsel %vm267, %v349, %v348
    %v351 = vsub.s32 4, %v327
    %v352 = vsel %vm267, %v351, %v327
    %v353 = vsel %vm266, %v264, %v350
    %v354 = vsel %vm266, 0, %v352
    %v355 = vcosq.f32.pop %v353
    %v356 = vsinq.f32.pop %v353
    %vm357 = vweird.f32 %v264
    %v358 = vadd.s32 %v354, 3
    %v359 = vand.u32 %v358, 3
    %vm360 = vcmp.lt.s32.totalorder %v359, 2
    %vm361 = vcmp.eq.s32.totalorder %v359, 0
    %v362 = vxor.u32 %v356, 2147483648
    %v363 = vsel %vm361, %v355, %v362
    %vm364 = vcmp.eq.s32.totalorder %v359, 2
    %v365 = vxor.u32 %v355, 2147483648
    %v366 = vsel %vm364, %v365, %v356
    %v367 = vsel %vm360, %v363, %v366
    %v368 = vsel %vm357, nan, %v367
    %v371 = vcombine.high %v150, %v150
    %v373 = vunpack.c.l.s4 1966171168
    %v374 = vunpack.c.0.s8 %v373
    %v375 = vlaneseq
    %v376 = vshrl.u32 %v375, 7
    %v377 = vsub.s32 %v374, %v376
    %v378 = vrot.slane %v150, %v377
    %v380 = vunpack.c.l.s4 1966171168
    %v381 = vunpack.c.0.s8 %v380
    %v382 = vlaneseq
    %v383 = vshrl.u32 %v382, 7
    %v384 = vsub.s32 %v381, %v383
    %v385 = vrot.slane %v371, %v384
    %v386 = vcombine.high %v378, %v378
    %v387 = vcombine.high %v385, %v385
    %v389 = vunpack.c.l.s4 1966171168
    %v390 = vunpack.c.0.s8 %v389
    %v391 = vlaneseq
    %v392 = vshrl.u32 %v391, 7
    %v393 = vsub.s32 %v390, %v392
    %v394 = vrot.slane %v378, %v393
    %v396 = vunpack.c.l.s4 1966171168
    %v397 = vunpack.c.0.s8 %v396
    %v398 = vlaneseq
    %v399 = vshrl.u32 %v398, 7
    %v400 = vsub.s32 %v397, %v399
    %v401 = vrot.slane %v385, %v400
    %v403 = vunpack.c.l.s4 1966171168
    %v404 = vunpack.c.0.s8 %v403
    %v405 = vlaneseq
    %v406 = vshrl.u32 %v405, 7
    %v407 = vsub.s32 %v404, %v406
    %v408 = vrot.slane %v386, %v407
    %v410 = vunpack.c.l.s4 1966171168
    %v411 = vunpack.c.0.s8 %v410
    %v412 = vlaneseq
    %v413 = vshrl.u32 %v412, 7
    %v414 = vsub.s32 %v411, %v413
    %v415 = vrot.slane %v387, %v414
    %v416 = vcombine.high %v394, %v394
    %v417 = vcombine.high %v401, %v401
    %v418 = vcombine.high %v408, %v408
    %v419 = vcombine.high %v415, %v415
    %v420 = vcombine.high %v254, %v254
    %v422 = vunpack.c.l.s4 1966171168
    %v423 = vunpack.c.0.s8 %v422
    %v424 = vlaneseq
    %v425 = vshrl.u32 %v424, 7
    %v426 = vsub.s32 %v423, %v425
    %v427 = vrot.slane %v254, %v426
    %v429 = vunpack.c.l.s4 1966171168
    %v430 = vunpack.c.0.s8 %v429
    %v431 = vlaneseq
    %v432 = vshrl.u32 %v431, 7
    %v433 = vsub.s32 %v430, %v432
    %v434 = vrot.slane %v420, %v433
    %v435 = vcombine.high %v427, %v427
    %v436 = vcombine.high %v434, %v434
    %v438 = vunpack.c.l.s4 1966171168
    %v439 = vunpack.c.0.s8 %v438
    %v440 = vlaneseq
    %v441 = vshrl.u32 %v440, 7
    %v442 = vsub.s32 %v439, %v441
    %v443 = vrot.slane %v427, %v442
    %v445 = vunpack.c.l.s4 1966171168
    %v446 = vunpack.c.0.s8 %v445
    %v447 = vlaneseq
    %v448 = vshrl.u32 %v447, 7
    %v449 = vsub.s32 %v446, %v448
    %v450 = vrot.slane %v434, %v449
    %v452 = vunpack.c.l.s4 1966171168
    %v453 = vunpack.c.0.s8 %v452
    %v454 = vlaneseq
    %v455 = vshrl.u32 %v454, 7
    %v456 = vsub.s32 %v453, %v455
    %v457 = vrot.slane %v435, %v456
    %v459 = vunpack.c.l.s4 1966171168
    %v460 = vunpack.c.0.s8 %v459
    %v461 = vlaneseq
    %v462 = vshrl.u32 %v461, 7
    %v463 = vsub.s32 %v460, %v462
    %v464 = vrot.slane %v436, %v463
    %v465 = vcombine.high %v443, %v443
    %v466 = vcombine.high %v450, %v450
    %v467 = vcombine.high %v457, %v457
    %v468 = vcombine.high %v464, %v464
    %v469 = vlaneseq
    %v470 = vshrl.u32 %v469, 7
    %v471 = vsub.s32 0, %v470
    %v472 = vrot.slane %v394, %v471
    %v473 = vlaneseq
    %v474 = vshrl.u32 %v473, 7
    %v475 = vsub.s32 0, %v474
    %v476 = vrot.slane %v408, %v475
    %v477 = vlaneseq
    %v478 = vshrl.u32 %v477, 7
    %v479 = vsub.s32 0, %v478
    %v480 = vrot.slane %v416, %v479
    %v481 = vlaneseq
    %v482 = vshrl.u32 %v481, 7
    %v483 = vsub.s32 0, %v482
    %v484 = vrot.slane %v418, %v483
    %v485 = vlaneseq
    %v486 = vshrl.u32 %v485, 7
    %v487 = vsub.s32 0, %v486
    %v488 = vrot.slane %v401, %v487
    %v489 = vlaneseq
    %v490 = vshrl.u32 %v489, 7
    %v491 = vsub.s32 0, %v490
    %v492 = vrot.slane %v415, %v491
    %v493 = vlaneseq
    %v494 = vshrl.u32 %v493, 7
    %v495 = vsub.s32 0, %v494
    %v496 = vrot.slane %v417, %v495
    %v497 = vlaneseq
    %v498 = vshrl.u32 %v497, 7
    %v499 = vsub.s32 0, %v498
    %v500 = vrot.slane %v419, %v499
    %v501 = vlaneseq
    %v502 = vshrl.u32 %v501, 7
    %v503 = vsub.s32 0, %v502
    %v504 = vrot.slane %v443, %v503
    %v505 = vlaneseq
    %v506 = vshrl.u32 %v505, 7
    %v507 = vsub.s32 0, %v506
    %v508 = vrot.slane %v457, %v507
    %v509 = vlaneseq
    %v510 = vshrl.u32 %v509, 7
    %v511 = vsub.s32 0, %v510
    %v512 = vrot.slane %v465, %v511
    %v513 = vlaneseq
    %v514 = vshrl.u32 %v513, 7
    %v515 = vsub.s32 0, %v514
    %v516 = vrot.slane %v467, %v515
    %v517 = vlaneseq
    %v518 = vshrl.u32 %v517, 7
    %v519 = vsub.s32 0, %v518
    %v520 = vrot.slane %v450, %v519
    %v521 = vlaneseq
    %v522 = vshrl.u32 %v521, 7
    %v523 = vsub.s32 0, %v522
    %v524 = vrot.slane %v464, %v523
    %v525 = vlaneseq
    %v526 = vshrl.u32 %v525, 7
    %v527 = vsub.s32 0, %v526
    %v528 = vrot.slane %v466, %v527
    %v529 = vlaneseq
    %v530 = vshrl.u32 %v529, 7
    %v531 = vsub.s32 0, %v530
    %v532 = vrot.slane %v468, %v531
    %v549 = vadd.f32 %v472, %v368
    %v550 = vadd.f32 %v476, %v368
    %v551 = vadd.f32 %v480, %v368
    %v552 = vadd.f32 %v484, %v368
    %v553 = vadd.f32 %v488, %v368
    %v554 = vadd.f32 %v492, %v368
    %v555 = vadd.f32 %v496, %v368
    %v556 = vadd.f32 %v500, %v368
    %v557 = vadd.f32 %v504, %v368
    %v558 = vadd.f32 %v508, %v368
    %v559 = vadd.f32 %v512, %v368
    %v560 = vadd.f32 %v516, %v368
    %v561 = vadd.f32 %v520, %v368
    %v562 = vadd.f32 %v524, %v368
    %v563 = vadd.f32 %v528, %v368
    %v564 = vadd.f32 %v532, %v368
    %565 = vst [vmem:[#allocation5] sm:$0xf] %v549
    %566 = vst [vmem:[#allocation5 + $0x4] sm:$0xf] %v550
    %567 = vst [vmem:[#allocation5 + $0x8] sm:$0xf] %v551
    %568 = vst [vmem:[#allocation5 + $0xc] sm:$0xf] %v552
    %569 = vst [vmem:[#allocation5 + $0x10] sm:$0xf] %v553
    %570 = vst [vmem:[#allocation5 + $0x14] sm:$0xf] %v554
    %571 = vst [vmem:[#allocation5 + $0x18] sm:$0xf] %v555
    %572 = vst [vmem:[#allocation5 + $0x1c] sm:$0xf] %v556
    %573 = vst [vmem:[#allocation5 + $0x20] sm:$0xf] %v557
    %574 = vst [vmem:[#allocation5 + $0x24] sm:$0xf] %v558
    %575 = vst [vmem:[#allocation5 + $0x28] sm:$0xf] %v559
    %576 = vst [vmem:[#allocation5 + $0x2c] sm:$0xf] %v560
    %577 = vst [vmem:[#allocation5 + $0x30] sm:$0xf] %v561
    %578 = vst [vmem:[#allocation5 + $0x34] sm:$0xf] %v562
    %579 = vst [vmem:[#allocation5 + $0x38] sm:$0xf] %v563
    %580 = vst [vmem:[#allocation5 + $0x3c] sm:$0xf] %v564
    // Predicated region
    $region10: #{tpu_custom_call.1} parent=1 // pred_check
      _
    $region11: #{tpu_custom_call.1} parent=1 // pred_check_branch
      %582 = sbr.rel (0) target = $region13
    $region12: #{tpu_custom_call.1} parent=1 // pred_region
      %s584 = ssub.s32 1024, 1024
      %585 = vsyncadd [#allocation4], %s584
      %s586 = sshll.u32 [#allocation5], 4
      %s587 = int_to_ptr.vmem [resolvable:$true] %s586
      %592 = dma.vmem_to_hbm [thread:$0]  %s587, 1024, %s1, [#allocation4], 64, 64, 4
    $region13: #{tpu_custom_call.1} parent=1 // pred_fallthru
      _
    // Predicated region
    $region14: #{tpu_custom_call.1} parent=1 // pred_check
      _
    $region15: #{tpu_custom_call.1} parent=1 // pred_check_branch
      %594 = sbr.rel (0) target = $region17
    $region16: #{tpu_custom_call.1} parent=1 // pred_region
      %595 = dma.done [#allocation4], 1024
    $region17: #{tpu_custom_call.1} parent=1 // pred_fallthru
      _
    %596 = vsyncpa [#allocation3], 1
    %597 = vsyncpa [#allocation4], 1

</llo_original>
